<compile_context>
chip_gen: v7x
topology: tpu7x:2x2x1
jax: 0.10.0
libtpu: 0.0.40
codegen_flags: <defaults>
</compile_context>

<pallas_src>
import functools

import jax
import jax.numpy as jnp
from jax import lax
from jax.experimental import pallas as pl
from jax.experimental.pallas import tpu as pltpu

_STREAM_VMEM_BUDGET = 28 * 1024 * 1024   # double-buffered conf+gt tiles
_VMEM_LIMIT_BYTES = 40 * 1024 * 1024     # scoped VMEM; leaves headroom on v7x (64 MiB)
_ROW_TILE_CAP = 512


def _round_up(x, m):
    return (x + m - 1) // m * m


def _pick_row_tile(rows, cols):
    """Largest row tile (multiple of 8) whose double-buffered conf+gt tiles fit budget."""
    if rows <= 8:
        return max(rows, 1)                      # full-extent sublane dim is legal
    per_row = 2 * cols * 4 * 2                   # conf+gt, f32, double-buffered
    t = max(8, _STREAM_VMEM_BUDGET // per_row)
    t = min(t, _ROW_TILE_CAP, _round_up(rows, 8))
    return max(8, (t // 8) * 8)


# ---------------------------------------------------------------------------
# Focal-loss partial-sum kernels (shared by coarse / cascade / detector losses).
# Per leading-index (batch) partials: pos_loss_sum, pos_count, neg_loss_sum, neg_count
# ---------------------------------------------------------------------------
def _row_valid_mask(shape, row0, rows):
    return (lax.broadcasted_iota(jnp.int32, shape, 0) + row0) < rows


def _init_outputs(i, refs):
    @pl.when(i == 0)
    def _():
        for r in refs:
            r[...] = jnp.zeros_like(r)


def _focal_accumulate(conf, gt, w, valid, alpha, gamma,
                      ps_ref, pc_ref, ns_ref, nc_ref):
    conf = jnp.clip(conf, 1e-6, 1.0 - 1e-6)
    pos = gt == 1.0
    neg = gt == 0.0
    if valid is not None:
        pos = jnp.logical_and(pos, valid)
        neg = jnp.logical_and(neg, valid)

    # Fused pos/neg branch: p = probability assigned to the "true" class.
    p = jnp.where(pos, conf, 1.0 - conf)
    one_m = 1.0 - p
    if float(gamma) == float(int(gamma)) and 0 <= int(gamma) <= 8:
        # integer gamma (e.g. 2.0): pure VPU multiplies, no EUP transcendentals
        pw = jnp.ones_like(one_m)
        for _ in range(int(gamma)):
            pw = pw * one_m
    else:
        pw = jnp.exp(gamma * jnp.log(one_m))     # fallback for non-integer gamma
    loss = (-alpha) * pw * jnp.log(p)
    if w is not None:
        loss = loss * w

    ps_ref[...] += jnp.sum(jnp.where(pos, loss, 0.0), keepdims=True)
    pc_ref[...] += jnp.sum(pos.astype(jnp.float32), keepdims=True)
    ns_ref[...] += jnp.sum(jnp.where(neg, loss, 0.0), keepdims=True)
    nc_ref[...] += jnp.sum(neg.astype(jnp.float32), keepdims=True)


def _focal_nw_kernel(conf_ref, gt_ref, ps_ref, pc_ref, ns_ref, nc_ref,
                     *, alpha, gamma, rows):
    i = pl.program_id(1)
    _init_outputs(i, (ps_ref, pc_ref, ns_ref, nc_ref))
    conf = conf_ref[...]
    gt = gt_ref[...]
    rt = conf.shape[0]
    valid = _row_valid_mask(conf.shape, i * rt, rows) if rows % rt != 0 else None
    _focal_accumulate(conf, gt, None, valid, alpha, gamma,
                      ps_ref, pc_ref, ns_ref, nc_ref)


def _focal_w_kernel(conf_ref, gt_ref, m0_ref, m1_ref,
                    ps_ref, pc_ref, ns_ref, nc_ref, *, alpha, gamma, rows):
    i = pl.program_id(1)
    _init_outputs(i, (ps_ref, pc_ref, ns_ref, nc_ref))
    conf = conf_ref[...]
    gt = gt_ref[...]
    rt = conf.shape[0]
    valid = _row_valid_mask(conf.shape, i * rt, rows) if rows % rt != 0 else None
    w = m0_ref[...] * m1_ref[...]                # (rt,1)*(1,C) -> (rt,C), in-kernel weight
    _focal_accumulate(conf, gt, w, valid, alpha, gamma,
                      ps_ref, pc_ref, ns_ref, nc_ref)


def _focal_partial_sums(conf, gt, m0=None, m1=None, *, alpha, gamma):
    """conf, gt: (B, R, C). m0: (B, R, 1) or None, m1: (B, 1, C) or None.
    Returns per-B partials (pos_sum, pos_cnt, neg_sum, neg_cnt), each shape (B,)."""
    B, R, C = conf.shape
    conf = conf.astype(jnp.float32)
    gt = gt.astype(jnp.float32)
    row_tile = _pick_row_tile(R, C)
    n_blk = pl.cdiv(R, row_tile)

    def tile_map(n, i):
        return (n, i, 0)

    in_specs = [pl.BlockSpec((None, row_tile, C), tile_map),
                pl.BlockSpec((None, row_tile, C), tile_map)]
    args = [conf, gt]
    if m0 is not None:
        in_specs += [pl.BlockSpec((None, row_tile, 1), tile_map),
                     pl.BlockSpec((None, 1, C), lambda n, i: (n, 0, 0))]
        args += [m0.astype(jnp.float32), m1.astype(jnp.float32)]
        kernel = functools.partial(_focal_w_kernel, alpha=alpha, gamma=gamma, rows=R)
    else:
        kernel = functools.partial(_focal_nw_kernel, alpha=alpha, gamma=gamma, rows=R)

    scalar = jax.ShapeDtypeStruct((B, 1, 1), jnp.float32)
    out_spec = pl.BlockSpec((None, 1, 1), lambda n, i: (n, 0, 0))
    outs = pl.pallas_call(
        kernel,
        out_shape=(scalar,) * 4,
        grid=(B, n_blk),
        in_specs=in_specs,
        out_specs=(out_spec,) * 4,
        compiler_params=pltpu.CompilerParams(
            dimension_semantics=("parallel", "arbitrary"),
            vmem_limit_bytes=_VMEM_LIMIT_BYTES,
        ),
    )(*args)
    return tuple(o.reshape(B) for o in outs)


def _combine_focal(ps, pc, ns, nc, pos_w, neg_w):
    # Torch edge-case ("no positives/negatives" -> dummy element with weight 0 and
    # class weight 0) makes that term 0; jnp.where reproduces it.
    ps, pc, ns, nc = jnp.sum(ps), jnp.sum(pc), jnp.sum(ns), jnp.sum(nc)
    pos_term = jnp.where(pc > 0, pos_w * ps / jnp.maximum(pc, 1.0), 0.0)
    neg_term = jnp.where(nc > 0, neg_w * ns / jnp.maximum(nc, 1.0), 0.0)
    return pos_term + neg_term


def coarse_focal_loss(conf, conf_gt, masks, *, alpha, gamma, pos_w, neg_w):
    N, HW0, HW1 = conf.shape
    if masks is None:
        sums = _focal_partial_sums(conf, conf_gt, alpha=alpha, gamma=gamma)
    else:
        m0, m1 = masks
        sums = _focal_partial_sums(conf, conf_gt,
                                   m0.reshape(N, HW0, 1), m1.reshape(N, 1, HW1),
                                   alpha=alpha, gamma=gamma)
    return _combine_focal(*sums, pos_w, neg_w)


def cascade_focal_loss(conf, conf_gt, *, alpha, gamma, pos_w, neg_w):
    sums = _focal_partial_sums(conf[None], conf_gt[None], alpha=alpha, gamma=gamma)
    return _combine_focal(*sums, pos_w, neg_w)


def cascade_and_detector_losses(wconf, wlabel, dconf, dlabel,
                                *, alpha, gamma, pos_w, neg_w):
    # Batch the two small (N, K) matrices into one pallas_call; per-B partials keep
    # their "no positives" handling independent.
    conf = jnp.stack([wconf, dconf], axis=0)
    gt = jnp.stack([wlabel, dlabel], axis=0)
    ps, pc, ns, nc = _focal_partial_sums(conf, gt, alpha=alpha, gamma=gamma)
    loss_cas = _combine_focal(ps[0], pc[0], ns[0], nc[0], pos_w, neg_w)
    loss_det = _combine_focal(ps[1], pc[1], ns[1], nc[1], pos_w, neg_w)
    return loss_cas, loss_det


# ---------------------------------------------------------------------------
# Fine-level l2-with-std loss kernel.
# f_ref: (3, Mp) = [x; y; std], gt_ref: (2, Mp) = [gt_x; gt_y]
# ---------------------------------------------------------------------------
def _fine_l2_std_kernel(f_ref, gt_ref, sum_ref, cnt_ref, *, m, thr):
    f = f_ref[...]
    gt = gt_ref[...]
    mp = gt.shape[-1]
    valid = lax.broadcasted_iota(jnp.int32, (1, mp), 1) < m
    inf_norm = jnp.max(jnp.abs(gt), axis=0, keepdims=True)
    correct = jnp.logical_and(inf_norm < thr, valid)

    inv_std = 1.0 / jnp.maximum(f[2:3, :], 1e-10)
    inv_std = jnp.where(valid, inv_std, 0.0)
    mean_inv = jnp.sum(inv_std, keepdims=True) / m
    w = inv_std / mean_inv

    off = gt - f[0:2, :]
    l2 = jnp.sum(off * off, axis=0, keepdims=True)

    sum_ref[...] = jnp.sum(jnp.where(correct, l2 * w, 0.0), keepdims=True)
    cnt_ref[...] = jnp.sum(correct.astype(jnp.float32), keepdims=True)


def fine_l2_std_loss(expec_f, expec_f_gt, *, thr):
    M = expec_f.shape[0]
    if M == 0:   # static-shape guard: no matches -> fine loss contributes 0
        return jnp.float32(0.0)
    Mp = _round_up(M, 128)
    f_t = jnp.zeros((3, Mp), jnp.float32).at[:, :M].set(expec_f.T.astype(jnp.float32))
    gt_t = jnp.zeros((2, Mp), jnp.float32).at[:, :M].set(expec_f_gt.T.astype(jnp.float32))
    scalar = jax.ShapeDtypeStruct((1, 1), jnp.float32)
    s, c = pl.pallas_call(
        functools.partial(_fine_l2_std_kernel, m=M, thr=thr),
        out_shape=(scalar, scalar),
    )(f_t, gt_t)
    # If no correct matches exist the torch training path zeroes the dummy weight -> 0.
    return jnp.where(c[0, 0] > 0, s[0, 0] / jnp.maximum(c[0, 0], 1.0), 0.0)


# ---------------------------------------------------------------------------
# CascadeLoss forward (glue in plain JAX, hot reductions in Pallas kernels).
# ---------------------------------------------------------------------------
class CascadeLossPallas:
    def __init__(self, config, opt_coarse=True):
        self.config = config
        self.opt_coarse = opt_coarse
        self.loss_config = config['loftr']['loss']
        self.match_type = config['loftr']['match_coarse']['match_type']
        self.sparse_spvs = config['loftr']['match_coarse']['sparse_spvs']
        self.coarest_level = config['loftr']['coarse_level']
        self.cascade_levels = config['loftr']['cascade_levels']
        self.correct_thr = self.loss_config['fine_correct_thr']
        self.c_pos_w = self.loss_config['pos_weight']
        self.c_neg_w = self.loss_config['neg_weight']
        self.fine_type = self.loss_config['fine_type']

    def compute_c_weight(self, data):
        # The (N, HW0, HW1) outer product is never materialized; the kernel forms it.
        k0, k1 = f'mask0_{self.coarest_level}c', f'mask1_{self.coarest_level}c'
        if k0 in data:
            m0 = data[k0].reshape(data[k0].shape[0], -1).astype(jnp.float32)
            m1 = data[k1].reshape(data[k1].shape[0], -1).astype(jnp.float32)
            return m0, m1
        return None

    def __call__(self, data):
        lc = self.loss_config
        alpha, gamma = lc['focal_alpha'], lc['focal_gamma']
        loss_scalars = {}

        if self.opt_coarse:
            # TODO(synk): only coarse_type=='focal' with dense supervision implemented
            # (sparse_spvs / sinkhorn / cross_entropy branches not translated).
            masks = self.compute_c_weight(data)
            loss_c = coarse_focal_loss(
                data[f'stage_{self.coarest_level}c']['conf_matrix'],
                data[f'gt_stage_{self.coarest_level}c']['conf_matrix_gt'],
                masks, alpha=alpha, gamma=gamma,
                pos_w=self.c_pos_w, neg_w=self.c_neg_w) * lc['coarse_weight']
            loss = loss_c
            loss_scalars[f'loss_{self.coarest_level}c'] = loss_c
        else:
            loss = jnp.float32(0.0)

        for level in self.cascade_levels:
            key = f'stage_{level}c'
            if key not in data:
                continue
            wconf = data[key]['window_conf_matrix']
            wlabel = data[key]['window_gt_label']
            has_det = ('detector_window_conf_matrix' in data[key]
                       and 'detector_window_gt_label' in data[key])
            if has_det and data[key]['detector_window_conf_matrix'].shape == wconf.shape:
                loss_cas, loss_det = cascade_and_detector_losses(
                    wconf, wlabel,
                    data[key]['detector_window_conf_matrix'],
                    data[key]['detector_window_gt_label'],
                    alpha=alpha, gamma=gamma,
                    pos_w=self.c_pos_w, neg_w=self.c_neg_w)
                loss_cas = loss_cas * lc['cascade_weight']
                loss_det = loss_det * lc['detector_weight']
                loss = loss + loss_cas + loss_det
                loss_scalars[f'loss_{level}c'] = loss_cas
                loss_scalars[f'loss_{level}c_det'] = loss_det
            else:
                loss_cas = cascade_focal_loss(
                    wconf, wlabel, alpha=alpha, gamma=gamma,
                    pos_w=self.c_pos_w, neg_w=self.c_neg_w) * lc['cascade_weight']
                loss = loss + loss_cas
                loss_scalars[f'loss_{level}c'] = loss_cas
                if has_det:
                    loss_det = cascade_focal_loss(
                        data[key]['detector_window_conf_matrix'],
                        data[key]['detector_window_gt_label'],
                        alpha=alpha, gamma=gamma,
                        pos_w=self.c_pos_w, neg_w=self.c_neg_w) * lc['detector_weight']
                    loss = loss + loss_det
                    loss_scalars[f'loss_{level}c_det'] = loss_det

        if 'expec_f' in data:
            # TODO(synk): only fine_type == 'l2_with_std' implemented ('l2' analogous).
            loss_f = fine_l2_std_loss(data['expec_f'], data['expec_f_gt'],
                                      thr=self.correct_thr)
            loss = loss + loss_f * lc['fine_weight']
            loss_scalars['loss_f'] = loss_f

        loss_scalars['loss'] = loss
        return loss, loss_scalars


# ---------------------------------------------------------------------------
# Pure-JAX reference (same math, no Pallas) for a sanity check.
# ---------------------------------------------------------------------------
def _ref_focal(conf, gt, weight, alpha, gamma, pos_w, neg_w):
    conf = jnp.clip(conf.astype(jnp.float32), 1e-6, 1 - 1e-6)
    gt = gt.astype(jnp.float32)
    w = weight.astype(jnp.float32)
    powg = lambda x: jnp.exp(gamma * jnp.log(x))
    pos, neg = gt == 1.0, gt == 0.0
    lp = -alpha * powg(1 - conf) * jnp.log(conf) * w
    ln = -alpha * powg(conf) * jnp.log(1 - conf) * w
    pc = jnp.sum(pos.astype(jnp.float32))
    nc = jnp.sum(neg.astype(jnp.float32))
    pt = jnp.where(pc > 0, pos_w * jnp.sum(jnp.where(pos, lp, 0.)) / jnp.maximum(pc, 1.), 0.)
    nt = jnp.where(nc > 0, neg_w * jnp.sum(jnp.where(neg, ln, 0.)) / jnp.maximum(nc, 1.), 0.)
    return pt + nt


def _ref_fine(f, gt, thr):
    correct = jnp.max(jnp.abs(gt), axis=1) < thr
    inv = 1.0 / jnp.maximum(f[:, 2], 1e-10)
    w = inv / jnp.mean(inv)
    l2 = jnp.sum((gt - f[:, :2]) ** 2, axis=-1)
    cnt = jnp.sum(correct.astype(jnp.float32))
    return jnp.where(cnt > 0,
                     jnp.sum(jnp.where(correct, l2 * w, 0.0)) / jnp.maximum(cnt, 1.0),
                     0.0)


if __name__ == "__main__":
    config = {
        'loftr': {
            'coarse_level': '8',
            'cascade_levels': ['4'],
            'match_coarse': {'match_type': 'dual_softmax', 'sparse_spvs': False},
            'loss': {
                'coarse_type': 'focal',
                'cascade_type': 'focal',
                'fine_type': 'l2_with_std',
                'focal_alpha': 0.25,
                'focal_gamma': 2.0,
                'pos_weight': 1.0,
                'neg_weight': 1.0,
                'coarse_weight': 1.0,
                'cascade_weight': 1.0,
                'detector_weight': 0.5,
                'fine_weight': 1.0,
                'fine_correct_thr': 1.0,
            },
        }
    }

    key = jax.random.PRNGKey(0)
    ks = jax.random.split(key, 12)
    N, H, W = 2, 8, 8
    HW = H * W                      # 64
    K = 128                         # cascade window candidates
    M = 64                          # fine matches

    conf = jax.random.uniform(ks[0], (N, HW, HW), jnp.float32, 0.01, 0.99)
    conf_gt = jax.random.bernoulli(ks[1], 0.1, (N, HW, HW)).astype(jnp.float32)
    mask0 = jax.random.bernoulli(ks[2], 0.9, (N, H, W))
    mask1 = jax.random.bernoulli(ks[3], 0.9, (N, H, W))

    wconf = jax.random.uniform(ks[4], (N, K), jnp.float32, 0.01, 0.99)
    wlabel = jax.random.bernoulli(ks[5], 0.3, (N, K)).astype(jnp.float32)
    dconf = jax.random.uniform(ks[6], (N, K), jnp.float32, 0.01, 0.99)
    dlabel = jax.random.bernoulli(ks[7], 0.3, (N, K)).astype(jnp.float32)

    xy = jax.random.uniform(ks[8], (M, 2), jnp.float32, -0.5, 0.5)
    std = jax.random.uniform(ks[9], (M, 1), jnp.float32, 0.1, 1.0)
    expec_f = jnp.concatenate([xy, std], axis=1)          # (M, 3)
    expec_f_gt = jax.random.uniform(ks[10], (M, 2), jnp.float32, -2.0, 2.0)

    data = {
        'mask0_8c': mask0,
        'mask1_8c': mask1,
        'stage_8c': {'conf_matrix': conf},
        'gt_stage_8c': {'conf_matrix_gt': conf_gt},
        'stage_4c': {
            'window_conf_matrix': wconf,
            'window_gt_label': wlabel,
            'detector_window_conf_matrix': dconf,
            'detector_window_gt_label': dlabel,
        },
        'expec_f': expec_f,
        'expec_f_gt': expec_f_gt,
    }

    loss_mod = CascadeLossPallas(config)
    loss, scalars = loss_mod(data)
    loss = jax.block_until_ready(loss)

    # Reference check.
    lc = config['loftr']['loss']
    a, g = lc['focal_alpha'], lc['focal_gamma']
    cw = (mask0.reshape(N, -1).astype(jnp.float32)[:, :, None]
          * mask1.reshape(N, -1).astype(jnp.float32)[:, None, :])
    ref = _ref_focal(conf, conf_gt, cw, a, g, 1.0, 1.0) * lc['coarse_weight']
    ref += _ref_focal(wconf, wlabel, jnp.ones_like(wconf), a, g, 1.0, 1.0) * lc['cascade_weight']
    ref += _ref_focal(dconf, dlabel, jnp.ones_like(dconf), a, g, 1.0, 1.0) * lc['detector_weight']
    ref += _ref_fine(expec_f, expec_f_gt, lc['fine_correct_thr']) * lc['fine_weight']
    ref = jax.block_until_ready(ref)

    assert jnp.isfinite(loss), "non-finite loss"
    assert abs(float(loss) - float(ref)) <= 1e-3 * (1.0 + abs(float(ref))), \
        f"mismatch: pallas={float(loss)} ref={float(ref)}"
    print("KERNEL_OK")
</pallas_src>

<mosaic_0001>
module attributes {stable_mosaic.version = 11 : i64} {
  func.func @_focal_w_kernel(%arg0: i32, %arg1: i32, %arg2: memref<1x64x64xf32, #tpu.memory_space<vmem>>, %arg3: memref<1x64x64xf32, #tpu.memory_space<vmem>>, %arg4: memref<1x64x1xf32, #tpu.memory_space<vmem>>, %arg5: memref<1x1x64xf32, #tpu.memory_space<vmem>>, %arg6: memref<1x1x1xf32, #tpu.memory_space<vmem>>, %arg7: memref<1x1x1xf32, #tpu.memory_space<vmem>>, %arg8: memref<1x1x1xf32, #tpu.memory_space<vmem>>, %arg9: memref<1x1x1xf32, #tpu.memory_space<vmem>>) attributes {dimension_semantics = [#tpu.dimension_semantics<parallel>, #tpu.dimension_semantics<arbitrary>], iteration_bounds = array<i64: 2, 1>, scalar_prefetch = 0 : i64, scratch_operands = 0 : i64, tpu.core_type = #tpu.core_type<tc>, window_params = [{transform_indices = @transform_0, window_bounds = array<i64: 1, 64, 64>}, {transform_indices = @transform_1, window_bounds = array<i64: 1, 64, 64>}, {transform_indices = @transform_2, window_bounds = array<i64: 1, 64, 1>}, {transform_indices = @transform_3, window_bounds = array<i64: 1, 1, 64>}, {transform_indices = @transform_4, window_bounds = array<i64: 1, 1, 1>}, {transform_indices = @transform_5, window_bounds = array<i64: 1, 1, 1>}, {transform_indices = @transform_6, window_bounds = array<i64: 1, 1, 1>}, {transform_indices = @transform_7, window_bounds = array<i64: 1, 1, 1>}]} {
    %c0_i32 = arith.constant 0 : i32
    %0 = arith.cmpi eq, %arg1, %c0_i32 : i32
    %1 = arith.extui %0 : i1 to i32
    %c0_i32_0 = arith.constant 0 : i32
    %2 = arith.cmpi ne, %1, %c0_i32_0 : i32
    scf.if %2 {
      %cst_49 = arith.constant 0.000000e+00 : f32
      %87 = vector.broadcast %cst_49 : f32 to vector<1x1xf32>
      %c0_50 = arith.constant 0 : index
      %c0_51 = arith.constant 0 : index
      %c0_52 = arith.constant 0 : index
      %88 = vector.load %arg6[%c0_50, %c0_51, %c0_52] : memref<1x1x1xf32, #tpu.memory_space<vmem>>, vector<1x1x1xf32>
      %89 = vector.shape_cast %88 : vector<1x1x1xf32> to vector<1x1xf32>
      %90 = vector.shape_cast %87 : vector<1x1xf32> to vector<1x1x1xf32>
      tpu.vector_store %arg6[%c0_50, %c0_51, %c0_52], %90 {strides = array<i32>} : memref<1x1x1xf32, #tpu.memory_space<vmem>>, vector<1x1x1xf32>,
      %cst_53 = arith.constant 0.000000e+00 : f32
      %91 = vector.broadcast %cst_53 : f32 to vector<1x1xf32>
      %c0_54 = arith.constant 0 : index
      %c0_55 = arith.constant 0 : index
      %c0_56 = arith.constant 0 : index
      %92 = vector.load %arg7[%c0_54, %c0_55, %c0_56] : memref<1x1x1xf32, #tpu.memory_space<vmem>>, vector<1x1x1xf32>
      %93 = vector.shape_cast %92 : vector<1x1x1xf32> to vector<1x1xf32>
      %94 = vector.shape_cast %91 : vector<1x1xf32> to vector<1x1x1xf32>
      tpu.vector_store %arg7[%c0_54, %c0_55, %c0_56], %94 {strides = array<i32>} : memref<1x1x1xf32, #tpu.memory_space<vmem>>, vector<1x1x1xf32>,
      %cst_57 = arith.constant 0.000000e+00 : f32
      %95 = vector.broadcast %cst_57 : f32 to vector<1x1xf32>
      %c0_58 = arith.constant 0 : index
      %c0_59 = arith.constant 0 : index
      %c0_60 = arith.constant 0 : index
      %96 = vector.load %arg8[%c0_58, %c0_59, %c0_60] : memref<1x1x1xf32, #tpu.memory_space<vmem>>, vector<1x1x1xf32>
      %97 = vector.shape_cast %96 : vector<1x1x1xf32> to vector<1x1xf32>
      %98 = vector.shape_cast %95 : vector<1x1xf32> to vector<1x1x1xf32>
      tpu.vector_store %arg8[%c0_58, %c0_59, %c0_60], %98 {strides = array<i32>} : memref<1x1x1xf32, #tpu.memory_space<vmem>>, vector<1x1x1xf32>,
      %cst_61 = arith.constant 0.000000e+00 : f32
      %99 = vector.broadcast %cst_61 : f32 to vector<1x1xf32>
      %c0_62 = arith.constant 0 : index
      %c0_63 = arith.constant 0 : index
      %c0_64 = arith.constant 0 : index
      %100 = vector.load %arg9[%c0_62, %c0_63, %c0_64] : memref<1x1x1xf32, #tpu.memory_space<vmem>>, vector<1x1x1xf32>
      %101 = vector.shape_cast %100 : vector<1x1x1xf32> to vector<1x1xf32>
      %102 = vector.shape_cast %99 : vector<1x1xf32> to vector<1x1x1xf32>
      tpu.vector_store %arg9[%c0_62, %c0_63, %c0_64], %102 {strides = array<i32>} : memref<1x1x1xf32, #tpu.memory_space<vmem>>, vector<1x1x1xf32>,
    } else {
    }
    %c0 = arith.constant 0 : index
    %c0_1 = arith.constant 0 : index
    %c0_2 = arith.constant 0 : index
    %3 = vector.load %arg2[%c0, %c0_1, %c0_2] : memref<1x64x64xf32, #tpu.memory_space<vmem>>, vector<1x64x64xf32>
    %4 = vector.shape_cast %3 : vector<1x64x64xf32> to vector<64x64xf32>
    %c0_3 = arith.constant 0 : index
    %c0_4 = arith.constant 0 : index
    %c0_5 = arith.constant 0 : index
    %5 = vector.load %arg3[%c0_3, %c0_4, %c0_5] : memref<1x64x64xf32, #tpu.memory_space<vmem>>, vector<1x64x64xf32>
    %6 = vector.shape_cast %5 : vector<1x64x64xf32> to vector<64x64xf32>
    %c0_6 = arith.constant 0 : index
    %c0_7 = arith.constant 0 : index
    %c0_8 = arith.constant 0 : index
    %7 = vector.load %arg4[%c0_6, %c0_7, %c0_8] : memref<1x64x1xf32, #tpu.memory_space<vmem>>, vector<1x64x1xf32>
    %8 = vector.shape_cast %7 : vector<1x64x1xf32> to vector<64x1xf32>
    %c0_9 = arith.constant 0 : index
    %c0_10 = arith.constant 0 : index
    %c0_11 = arith.constant 0 : index
    %9 = vector.load %arg5[%c0_9, %c0_10, %c0_11] : memref<1x1x64xf32, #tpu.memory_space<vmem>>, vector<1x1x64xf32>
    %10 = vector.shape_cast %9 : vector<1x1x64xf32> to vector<1x64xf32>
    %11 = vector.broadcast %8 : vector<64x1xf32> to vector<64x64xf32>
    %12 = vector.broadcast %10 : vector<1x64xf32> to vector<64x64xf32>
    %13 = arith.mulf %11, %12 : vector<64x64xf32>
    %cst = arith.constant 9.99999997E-7 : f32
    %cst_12 = arith.constant 0.999998986 : f32
    %14 = vector.broadcast %cst : f32 to vector<64x64xf32>
    %15 = arith.maximumf %14, %4 : vector<64x64xf32>
    %16 = vector.broadcast %cst_12 : f32 to vector<64x64xf32>
    %17 = arith.minimumf %16, %15 : vector<64x64xf32>
    %cst_13 = arith.constant 1.000000e+00 : f32
    %18 = vector.broadcast %cst_13 : f32 to vector<64x64xf32>
    %19 = arith.cmpf oeq, %6, %18 : vector<64x64xf32>
    %cst_14 = arith.constant 0.000000e+00 : f32
    %20 = vector.broadcast %cst_14 : f32 to vector<64x64xf32>
    %21 = arith.cmpf oeq, %6, %20 : vector<64x64xf32>
    %cst_15 = arith.constant 1.000000e+00 : f32
    %22 = vector.broadcast %cst_15 : f32 to vector<64x64xf32>
    %23 = arith.subf %22, %17 : vector<64x64xf32>
    %24 = arith.select %19, %17, %23 : vector<64x64xi1>, vector<64x64xf32>
    %cst_16 = arith.constant 1.000000e+00 : f32
    %25 = vector.broadcast %cst_16 : f32 to vector<64x64xf32>
    %26 = arith.subf %25, %24 : vector<64x64xf32>
    %cst_17 = arith.constant 1.000000e+00 : f32
    %27 = vector.broadcast %cst_17 : f32 to vector<64x64xf32>
    %28 = arith.mulf %27, %26 : vector<64x64xf32>
    %29 = arith.mulf %28, %26 : vector<64x64xf32>
    %cst_18 = arith.constant -2.500000e-01 : f32
    %30 = vector.broadcast %cst_18 : f32 to vector<64x64xf32>
    %31 = arith.mulf %30, %29 : vector<64x64xf32>
    %32 = math.log %24 : vector<64x64xf32>
    %33 = arith.mulf %31, %32 : vector<64x64xf32>
    %34 = arith.mulf %33, %13 : vector<64x64xf32>
    %c0_19 = arith.constant 0 : index
    %c0_20 = arith.constant 0 : index
    %c0_21 = arith.constant 0 : index
    %35 = vector.load %arg6[%c0_19, %c0_20, %c0_21] : memref<1x1x1xf32, #tpu.memory_space<vmem>>, vector<1x1x1xf32>
    %36 = vector.shape_cast %35 : vector<1x1x1xf32> to vector<1x1xf32>
    %cst_22 = arith.constant 0.000000e+00 : f32
    %37 = vector.broadcast %cst_22 : f32 to vector<64x64xf32>
    %38 = arith.select %19, %34, %37 : vector<64x64xi1>, vector<64x64xf32>
    %39 = vector.shape_cast %38 : vector<64x64xf32> to vector<1x64x64xf32>
    %cst_23 = arith.constant dense<0.000000e+00> : vector<1xf32>
    %40 = vector.multi_reduction <add>, %39, %cst_23 [1, 2] : vector<1x64x64xf32> to vector<1xf32>
    %41 = vector.shape_cast %40 : vector<1xf32> to vector<1x1x1xf32>
    %42 = vector.extract %41[0, 0, 0] : f32 from vector<1x1x1xf32>
    %43 = vector.broadcast %42 : f32 to vector<1x1xf32>
    %44 = arith.addf %36, %43 : vector<1x1xf32>
    %c0_24 = arith.constant 0 : index
    %c0_25 = arith.constant 0 : index
    %c0_26 = arith.constant 0 : index
    %45 = vector.load %arg6[%c0_24, %c0_25, %c0_26] : memref<1x1x1xf32, #tpu.memory_space<vmem>>, vector<1x1x1xf32>
    %46 = vector.shape_cast %45 : vector<1x1x1xf32> to vector<1x1xf32>
    %47 = vector.shape_cast %44 : vector<1x1xf32> to vector<1x1x1xf32>
    tpu.vector_store %arg6[%c0_24, %c0_25, %c0_26], %47 {strides = array<i32>} : memref<1x1x1xf32, #tpu.memory_space<vmem>>, vector<1x1x1xf32>,
    %c0_27 = arith.constant 0 : index
    %c0_28 = arith.constant 0 : index
    %c0_29 = arith.constant 0 : index
    %48 = vector.load %arg7[%c0_27, %c0_28, %c0_29] : memref<1x1x1xf32, #tpu.memory_space<vmem>>, vector<1x1x1xf32>
    %49 = vector.shape_cast %48 : vector<1x1x1xf32> to vector<1x1xf32>
    %50 = arith.extui %19 : vector<64x64xi1> to vector<64x64xi32>
    %51 = arith.sitofp %50 : vector<64x64xi32> to vector<64x64xf32>
    %52 = vector.shape_cast %51 : vector<64x64xf32> to vector<1x64x64xf32>
    %cst_30 = arith.constant dense<0.000000e+00> : vector<1xf32>
    %53 = vector.multi_reduction <add>, %52, %cst_30 [1, 2] : vector<1x64x64xf32> to vector<1xf32>
    %54 = vector.shape_cast %53 : vector<1xf32> to vector<1x1x1xf32>
    %55 = vector.extract %54[0, 0, 0] : f32 from vector<1x1x1xf32>
    %56 = vector.broadcast %55 : f32 to vector<1x1xf32>
    %57 = arith.addf %49, %56 : vector<1x1xf32>
    %c0_31 = arith.constant 0 : index
    %c0_32 = arith.constant 0 : index
    %c0_33 = arith.constant 0 : index
    %58 = vector.load %arg7[%c0_31, %c0_32, %c0_33] : memref<1x1x1xf32, #tpu.memory_space<vmem>>, vector<1x1x1xf32>
    %59 = vector.shape_cast %58 : vector<1x1x1xf32> to vector<1x1xf32>
    %60 = vector.shape_cast %57 : vector<1x1xf32> to vector<1x1x1xf32>
    tpu.vector_store %arg7[%c0_31, %c0_32, %c0_33], %60 {strides = array<i32>} : memref<1x1x1xf32, #tpu.memory_space<vmem>>, vector<1x1x1xf32>,
    %c0_34 = arith.constant 0 : index
    %c0_35 = arith.constant 0 : index
    %c0_36 = arith.constant 0 : index
    %61 = vector.load %arg8[%c0_34, %c0_35, %c0_36] : memref<1x1x1xf32, #tpu.memory_space<vmem>>, vector<1x1x1xf32>
    %62 = vector.shape_cast %61 : vector<1x1x1xf32> to vector<1x1xf32>
    %cst_37 = arith.constant 0.000000e+00 : f32
    %63 = vector.broadcast %cst_37 : f32 to vector<64x64xf32>
    %64 = arith.select %21, %34, %63 : vector<64x64xi1>, vector<64x64xf32>
    %65 = vector.shape_cast %64 : vector<64x64xf32> to vector<1x64x64xf32>
    %cst_38 = arith.constant dense<0.000000e+00> : vector<1xf32>
    %66 = vector.multi_reduction <add>, %65, %cst_38 [1, 2] : vector<1x64x64xf32> to vector<1xf32>
    %67 = vector.shape_cast %66 : vector<1xf32> to vector<1x1x1xf32>
    %68 = vector.extract %67[0, 0, 0] : f32 from vector<1x1x1xf32>
    %69 = vector.broadcast %68 : f32 to vector<1x1xf32>
    %70 = arith.addf %62, %69 : vector<1x1xf32>
    %c0_39 = arith.constant 0 : index
    %c0_40 = arith.constant 0 : index
    %c0_41 = arith.constant 0 : index
    %71 = vector.load %arg8[%c0_39, %c0_40, %c0_41] : memref<1x1x1xf32, #tpu.memory_space<vmem>>, vector<1x1x1xf32>
    %72 = vector.shape_cast %71 : vector<1x1x1xf32> to vector<1x1xf32>
    %73 = vector.shape_cast %70 : vector<1x1xf32> to vector<1x1x1xf32>
    tpu.vector_store %arg8[%c0_39, %c0_40, %c0_41], %73 {strides = array<i32>} : memref<1x1x1xf32, #tpu.memory_space<vmem>>, vector<1x1x1xf32>,
    %c0_42 = arith.constant 0 : index
    %c0_43 = arith.constant 0 : index
    %c0_44 = arith.constant 0 : index
    %74 = vector.load %arg9[%c0_42, %c0_43, %c0_44] : memref<1x1x1xf32, #tpu.memory_space<vmem>>, vector<1x1x1xf32>
    %75 = vector.shape_cast %74 : vector<1x1x1xf32> to vector<1x1xf32>
    %76 = arith.extui %21 : vector<64x64xi1> to vector<64x64xi32>
    %77 = arith.sitofp %76 : vector<64x64xi32> to vector<64x64xf32>
    %78 = vector.shape_cast %77 : vector<64x64xf32> to vector<1x64x64xf32>
    %cst_45 = arith.constant dense<0.000000e+00> : vector<1xf32>
    %79 = vector.multi_reduction <add>, %78, %cst_45 [1, 2] : vector<1x64x64xf32> to vector<1xf32>
    %80 = vector.shape_cast %79 : vector<1xf32> to vector<1x1x1xf32>
    %81 = vector.extract %80[0, 0, 0] : f32 from vector<1x1x1xf32>
    %82 = vector.broadcast %81 : f32 to vector<1x1xf32>
    %83 = arith.addf %75, %82 : vector<1x1xf32>
    %c0_46 = arith.constant 0 : index
    %c0_47 = arith.constant 0 : index
    %c0_48 = arith.constant 0 : index
    %84 = vector.load %arg9[%c0_46, %c0_47, %c0_48] : memref<1x1x1xf32, #tpu.memory_space<vmem>>, vector<1x1x1xf32>
    %85 = vector.shape_cast %84 : vector<1x1x1xf32> to vector<1x1xf32>
    %86 = vector.shape_cast %83 : vector<1x1xf32> to vector<1x1x1xf32>
    tpu.vector_store %arg9[%c0_46, %c0_47, %c0_48], %86 {strides = array<i32>} : memref<1x1x1xf32, #tpu.memory_space<vmem>>, vector<1x1x1xf32>,
    return
  }
  func.func @transform_0(%arg0: i32, %arg1: i32) -> (i32, i32, i32) {
    %c0_i32 = arith.constant 0 : i32
    %c0_i32_0 = arith.constant 0 : i32
    return %arg0, %arg1, %c0_i32 : i32, i32, i32
  }
  func.func @transform_1(%arg0: i32, %arg1: i32) -> (i32, i32, i32) {
    %c0_i32 = arith.constant 0 : i32
    %c0_i32_0 = arith.constant 0 : i32
    return %arg0, %arg1, %c0_i32 : i32, i32, i32
  }
  func.func @transform_2(%arg0: i32, %arg1: i32) -> (i32, i32, i32) {
    %c0_i32 = arith.constant 0 : i32
    %c0_i32_0 = arith.constant 0 : i32
    return %arg0, %arg1, %c0_i32 : i32, i32, i32
  }
  func.func @transform_3(%arg0: i32, %arg1: i32) -> (i32, i32, i32) {
    %c0_i32 = arith.constant 0 : i32
    %c0_i32_0 = arith.constant 0 : i32
    %c0_i32_1 = arith.constant 0 : i32
    return %arg0, %c0_i32, %c0_i32_0 : i32, i32, i32
  }
  func.func @transform_4(%arg0: i32, %arg1: i32) -> (i32, i32, i32) {
    %c0_i32 = arith.constant 0 : i32
    %c0_i32_0 = arith.constant 0 : i32
    %c0_i32_1 = arith.constant 0 : i32
    return %arg0, %c0_i32, %c0_i32_0 : i32, i32, i32
  }
  func.func @transform_5(%arg0: i32, %arg1: i32) -> (i32, i32, i32) {
    %c0_i32 = arith.constant 0 : i32
    %c0_i32_0 = arith.constant 0 : i32
    %c0_i32_1 = arith.constant 0 : i32
    return %arg0, %c0_i32, %c0_i32_0 : i32, i32, i32
  }
  func.func @transform_6(%arg0: i32, %arg1: i32) -> (i32, i32, i32) {
    %c0_i32 = arith.constant 0 : i32
    %c0_i32_0 = arith.constant 0 : i32
    %c0_i32_1 = arith.constant 0 : i32
    return %arg0, %c0_i32, %c0_i32_0 : i32, i32, i32
  }
  func.func @transform_7(%arg0: i32, %arg1: i32) -> (i32, i32, i32) {
    %c0_i32 = arith.constant 0 : i32
    %c0_i32_0 = arith.constant 0 : i32
    %c0_i32_1 = arith.constant 0 : i32
    return %arg0, %c0_i32, %c0_i32_0 : i32, i32, i32
  }
}

</mosaic_0001>

<llo_original>
// kernel: tpu_custom_call.1
$region0: #{tpu_custom_call.1}
  #allocation0 [shape = 'u32[]', space=smem, size = 0x4, offset = 0x4, fixed_abs, tag = 'smem constant byte address 0x4 - core index']
  #allocation1 [shape = 'u32[144,128]{1,0:T(1,128)}', space=vmem, size = 0x12000, scoped, tag = 'internal scratch']
  %s0 = inlined_call_operand.vmem [shape: f32[2,64,64], index: 0, kind: input, shape index: {}]
  %s1 = inlined_call_operand.hbm [shape: f32[2,64,64], index: 1, kind: input, shape index: {}]
  %s2 = inlined_call_operand.vmem [shape: f32[2,64,1], index: 2, kind: input, shape index: {}]
  %s3 = inlined_call_operand.vmem [shape: f32[2,1,64], index: 3, kind: input, shape index: {}]
  %s4 = inlined_call_operand.vmem [shape: f32[2,1,1], index: 4, kind: output, shape index: {0}]
  %s5 = inlined_call_operand.vmem [shape: f32[2,1,1], index: 5, kind: output, shape index: {1}]
  %s6 = inlined_call_operand.vmem [shape: f32[2,1,1], index: 6, kind: output, shape index: {2}]
  %s7 = inlined_call_operand.vmem [shape: f32[2,1,1], index: 7, kind: output, shape index: {3}]
  %8 = xla_tuple %s4, %s5, %s6, %s7
  %s9 = sld [smem:[#allocation0]]
  $region81: #{tpu_custom_call.1} parent=0
    _
  %s11 = ssub.s32 1, %s9
  %s12 = scalar_select 0, %s11, %s9
  $region1: #{tpu_custom_call.1} parent=0
    #allocation2 [shape = 'u8[65536]{0}', space=vmem, size = 0x10000, scoped, tag = 'input window, operand 1']
    #allocation3 [shape = 's32[2]{0}', space=sflag, size = 0x8, scoped, tag = 'scoped memory for tpu_custom_call.1']
    %13 = vsyncpa [#allocation3], 0
    %s14 = scalar_lea.sflag [#allocation3], 1
    %15 = vsyncpa %s14, 0
    loop: start=0, step=1, limit=4
    $region2: #{tpu_custom_call.1} parent=1 // loop_pre_header
      _
    $region3: #{tpu_custom_call.1} parent=1 // loop_header
      %s17 = sphi 0, %s21
      %p18 = scmp.ge.s32.totalorder %s17, 4
      %s24 = sphi 0, %s36
      %s25 = sphi 0, %s32
      %s26 = sphi 0, %s24
      %s27 = sphi 0, %s25
      %s28 = sphi 0, %s26
      %s29 = sphi 0, %s27
      %s41 = sphi 0, %s43
      %s44 = sphi 0, %s41
      %s45 = sphi 0, %s44
      %s61 = sphi 0, %s45
      %s69 = sphi 0, %s71
      %s72 = sphi 0, %s69
      %s73 = sphi 0, %s72
      %s89 = sphi 0, %s73
      %s97 = sphi 0, %s99
      %s100 = sphi 0, %s97
      %s101 = sphi 0, %s100
      %s117 = sphi 0, %s101
      %s123 = sphi 0, %s125
      %s126 = sphi 0, %s123
      %s127 = sphi 0, %s126
      %s143 = sphi 0, %s127
      %s149 = sphi 0, %s151
      %s152 = sphi 0, %s149
      %s153 = sphi 0, %s152
      %s169 = sphi 0, %s153
      %s175 = sphi 0, %s177
      %s178 = sphi 0, %s175
      %s179 = sphi 0, %s178
      %s195 = sphi 0, %s179
      %s201 = sphi 0, %s203
      %s204 = sphi 0, %s201
      %s205 = sphi 0, %s204
      %s221 = sphi 0, %s205
      %s227 = sphi 0, %s229
      %s230 = sphi 0, %s227
      %s231 = sphi 0, %s230
      %s247 = sphi 0, %s231
    $region4: #{tpu_custom_call.1} parent=1 // loop_header_branch
      %20 = sbr.rel (%p18) target = $region8
    $region5: #{tpu_custom_call.1} parent=1 // loop_body
      %s22 = ssub.s32 %s17, 1
      %s23 = ssub.s32 %s17, 2
      %s30 = sadd.s32 1, %s25
      %p31 = scmp.ge.s32.totalorder %s30, 1
      %s32 = scalar_select %p31, 0, %s30
      %s33 = sadd.s32 1, %s24
      %s34 = scalar_select %p31, %s33, %s24
      %p35 = scmp.ge.s32.totalorder %s34, 2
      %s36 = scalar_select %p35, 0, %s34
      %s37 = ssub.s32 %s24, %s36
      %s38 = ssub.s32 %s25, %s32
      %s39 = sor.u32 %s37, %s38
      %p40 = scmp.eq.s32.totalorder %s39, 0
      %s42 = sadd.s32 %s41, 1
      %s43 = scalar_select %p40, %s41, %s42
      %p46 = pneg %p40
      %p47 = scmp.eq.s32.totalorder %s17, 1
      %p48 = por %p46, %p47
      %p49 = scmp.ne.s32.totalorder %s41, %s44
      %p50 = scmp.eq.s32.totalorder %s17, 0
      %p51 = por %p49, %p50
      %p52 = scmp.ne.s32.totalorder %s41, %s44
      %p53 = scmp.eq.s32.totalorder %s22, 1
      %p54 = por %p52, %p53
      %p55 = scmp.ne.s32.totalorder %s44, %s45
      %p56 = scmp.eq.s32.totalorder %s22, 0
      %p57 = por %p55, %p56
      %p58 = scmp.ne.s32.totalorder %s44, %s45
      %p59 = scmp.eq.s32.totalorder %s23, 1
      %p60 = por %p58, %p59
      %p62 = scmp.ne.s32.totalorder %s45, %s61
      %p63 = scmp.eq.s32.totalorder %s23, 0
      %p64 = por %p62, %p63
      %s65 = ssub.s32 %s24, %s36
      %s66 = ssub.s32 %s25, %s32
      %s67 = sor.u32 %s65, %s66
      %p68 = scmp.eq.s32.totalorder %s67, 0
      %s70 = sadd.s32 %s69, 1
      %s71 = scalar_select %p68, %s69, %s70
      %p74 = pneg %p68
      %p75 = scmp.eq.s32.totalorder %s17, 1
      %p76 = por %p74, %p75
      %p77 = scmp.ne.s32.totalorder %s69, %s72
      %p78 = scmp.eq.s32.totalorder %s17, 0
      %p79 = por %p77, %p78
      %p80 = scmp.ne.s32.totalorder %s69, %s72
      %p81 = scmp.eq.s32.totalorder %s22, 1
      %p82 = por %p80, %p81
      %p83 = scmp.ne.s32.totalorder %s72, %s73
      %p84 = scmp.eq.s32.totalorder %s22, 0
      %p85 = por %p83, %p84
      %p86 = scmp.ne.s32.totalorder %s72, %s73
      %p87 = scmp.eq.s32.totalorder %s23, 1
      %p88 = por %p86, %p87
      %p90 = scmp.ne.s32.totalorder %s73, %s89
      %p91 = scmp.eq.s32.totalorder %s23, 0
      %p92 = por %p90, %p91
      %s93 = ssub.s32 %s24, %s36
      %s94 = ssub.s32 %s25, %s32
      %s95 = sor.u32 %s93, %s94
      %p96 = scmp.eq.s32.totalorder %s95, 0
      %s98 = sadd.s32 %s97, 1
      %s99 = scalar_select %p96, %s97, %s98
      %p102 = pneg %p96
      %p103 = scmp.eq.s32.totalorder %s17, 1
      %p104 = por %p102, %p103
      %p105 = scmp.ne.s32.totalorder %s97, %s100
      %p106 = scmp.eq.s32.totalorder %s17, 0
      %p107 = por %p105, %p106
      %p108 = scmp.ne.s32.totalorder %s97, %s100
      %p109 = scmp.eq.s32.totalorder %s22, 1
      %p110 = por %p108, %p109
      %p111 = scmp.ne.s32.totalorder %s100, %s101
      %p112 = scmp.eq.s32.totalorder %s22, 0
      %p113 = por %p111, %p112
      %p114 = scmp.ne.s32.totalorder %s100, %s101
      %p115 = scmp.eq.s32.totalorder %s23, 1
      %p116 = por %p114, %p115
      %p118 = scmp.ne.s32.totalorder %s101, %s117
      %p119 = scmp.eq.s32.totalorder %s23, 0
      %p120 = por %p118, %p119
      %s121 = ssub.s32 %s24, %s36
      %p122 = scmp.eq.s32.totalorder %s121, 0
      %s124 = sadd.s32 %s123, 1
      %s125 = scalar_select %p122, %s123, %s124
      %p128 = pneg %p122
      %p129 = scmp.eq.s32.totalorder %s17, 1
      %p130 = por %p128, %p129
      %p131 = scmp.ne.s32.totalorder %s123, %s126
      %p132 = scmp.eq.s32.totalorder %s17, 0
      %p133 = por %p131, %p132
      %p134 = scmp.ne.s32.totalorder %s123, %s126
      %p135 = scmp.eq.s32.totalorder %s22, 1
      %p136 = por %p134, %p135
      %p137 = scmp.ne.s32.totalorder %s126, %s127
      %p138 = scmp.eq.s32.totalorder %s22, 0
      %p139 = por %p137, %p138
      %p140 = scmp.ne.s32.totalorder %s126, %s127
      %p141 = scmp.eq.s32.totalorder %s23, 1
      %p142 = por %p140, %p141
      %p144 = scmp.ne.s32.totalorder %s127, %s143
      %p145 = scmp.eq.s32.totalorder %s23, 0
      %p146 = por %p144, %p145
      %s147 = ssub.s32 %s24, %s36
      %p148 = scmp.eq.s32.totalorder %s147, 0
      %s150 = sadd.s32 %s149, 1
      %s151 = scalar_select %p148, %s149, %s150
      %p154 = pneg %p148
      %p155 = scmp.eq.s32.totalorder %s17, 1
      %p156 = por %p154, %p155
      %p157 = scmp.ne.s32.totalorder %s149, %s152
      %p158 = scmp.eq.s32.totalorder %s17, 0
      %p159 = por %p157, %p158
      %p160 = scmp.ne.s32.totalorder %s149, %s152
      %p161 = scmp.eq.s32.totalorder %s22, 1
      %p162 = por %p160, %p161
      %p163 = scmp.ne.s32.totalorder %s152, %s153
      %p164 = scmp.eq.s32.totalorder %s22, 0
      %p165 = por %p163, %p164
      %p166 = scmp.ne.s32.totalorder %s152, %s153
      %p167 = scmp.eq.s32.totalorder %s23, 1
      %p168 = por %p166, %p167
      %p170 = scmp.ne.s32.totalorder %s153, %s169
      %p171 = scmp.eq.s32.totalorder %s23, 0
      %p172 = por %p170, %p171
      %s173 = ssub.s32 %s24, %s36
      %p174 = scmp.eq.s32.totalorder %s173, 0
      %s176 = sadd.s32 %s175, 1
      %s177 = scalar_select %p174, %s175, %s176
      %p180 = pneg %p174
      %p181 = scmp.eq.s32.totalorder %s17, 1
      %p182 = por %p180, %p181
      %p183 = scmp.ne.s32.totalorder %s175, %s178
      %p184 = scmp.eq.s32.totalorder %s17, 0
      %p185 = por %p183, %p184
      %p186 = scmp.ne.s32.totalorder %s175, %s178
      %p187 = scmp.eq.s32.totalorder %s22, 1
      %p188 = por %p186, %p187
      %p189 = scmp.ne.s32.totalorder %s178, %s179
      %p190 = scmp.eq.s32.totalorder %s22, 0
      %p191 = por %p189, %p190
      %p192 = scmp.ne.s32.totalorder %s178, %s179
      %p193 = scmp.eq.s32.totalorder %s23, 1
      %p194 = por %p192, %p193
      %p196 = scmp.ne.s32.totalorder %s179, %s195
      %p197 = scmp.eq.s32.totalorder %s23, 0
      %p198 = por %p196, %p197
      %s199 = ssub.s32 %s24, %s36
      %p200 = scmp.eq.s32.totalorder %s199, 0
      %s202 = sadd.s32 %s201, 1
      %s203 = scalar_select %p200, %s201, %s202
      %p206 = pneg %p200
      %p207 = scmp.eq.s32.totalorder %s17, 1
      %p208 = por %p206, %p207
      %p209 = scmp.ne.s32.totalorder %s201, %s204
      %p210 = scmp.eq.s32.totalorder %s17, 0
      %p211 = por %p209, %p210
      %p212 = scmp.ne.s32.totalorder %s201, %s204
      %p213 = scmp.eq.s32.totalorder %s22, 1
      %p214 = por %p212, %p213
      %p215 = scmp.ne.s32.totalorder %s204, %s205
      %p216 = scmp.eq.s32.totalorder %s22, 0
      %p217 = por %p215, %p216
      %p218 = scmp.ne.s32.totalorder %s204, %s205
      %p219 = scmp.eq.s32.totalorder %s23, 1
      %p220 = por %p218, %p219
      %p222 = scmp.ne.s32.totalorder %s205, %s221
      %p223 = scmp.eq.s32.totalorder %s23, 0
      %p224 = por %p222, %p223
      %s225 = ssub.s32 %s24, %s36
      %p226 = scmp.eq.s32.totalorder %s225, 0
      %s228 = sadd.s32 %s227, 1
      %s229 = scalar_select %p226, %s227, %s228
      %p232 = pneg %p226
      %p233 = scmp.eq.s32.totalorder %s17, 1
      %p234 = por %p232, %p233
      %p235 = scmp.ne.s32.totalorder %s227, %s230
      %p236 = scmp.eq.s32.totalorder %s17, 0
      %p237 = por %p235, %p236
      %p238 = scmp.ne.s32.totalorder %s227, %s230
      %p239 = scmp.eq.s32.totalorder %s22, 1
      %p240 = por %p238, %p239
      %p241 = scmp.ne.s32.totalorder %s230, %s231
      %p242 = scmp.eq.s32.totalorder %s22, 0
      %p243 = por %p241, %p242
      %p244 = scmp.ne.s32.totalorder %s230, %s231
      %p245 = scmp.eq.s32.totalorder %s23, 1
      %p246 = por %p244, %p245
      %p248 = scmp.ne.s32.totalorder %s231, %s247
      %p249 = scmp.eq.s32.totalorder %s23, 0
      %p250 = por %p248, %p249
      %p251 = scmp.le.s32.totalorder 1, %s17
      %p252 = scmp.lt.s32.totalorder %s17, 3
      %p253 = pnand %p251, %p252
      %p254 = pneg %p253
      // Predicated region
      $region9: #{tpu_custom_call.1} parent=5 // pred_check
        _
      $region10: #{tpu_custom_call.1} parent=5 // pred_check_branch
        %256 = sbr.rel (%p253) target = $region12
      $region11: #{tpu_custom_call.1} parent=5 // pred_region
        %s257 = ssub.s32 %s17, 1
      $region12: #{tpu_custom_call.1} parent=5 // pred_fallthru
        _
      %p258 = scmp.lt.s32.totalorder %s17, 2
      // Predicated region
      $region13: #{tpu_custom_call.1} parent=5 // pred_check
        %p259 = pneg %p258
      $region14: #{tpu_custom_call.1} parent=5 // pred_check_branch
        %261 = sbr.rel (%p259) target = $region16
      $region15: #{tpu_custom_call.1} parent=5 // pred_region
        // Predicated region
        $region17: #{tpu_custom_call.1} parent=15 // pred_check
          %p262 = pneg %p51
        $region18: #{tpu_custom_call.1} parent=15 // pred_check_branch
          %264 = sbr.rel (%p262) target = $region20
        $region19: #{tpu_custom_call.1} parent=15 // pred_region
          %s265 = smul.u32 8, %s25
          %p266 = scmp.lt.s32.totalorder %s24, 1
          %s267 = scalar_select %p266, %s24, 1
          %p268 = scmp.lt.s32.totalorder %s265, 7
          %s269 = scalar_select %p268, %s265, 7
          %s270 = smul.addr %s267, 8
          %s271 = sadd.s32 %s269, %s270
          %s272 = smul.addr %s271, 8
          %s273 = scalar_lea.vmem %s0, %s272
          %s274 = smul.u32 8, %s25
        $region20: #{tpu_custom_call.1} parent=15 // pred_fallthru
          _
        // Predicated region
        $region21: #{tpu_custom_call.1} parent=15 // pred_check
          %p275 = pneg %p79
        $region22: #{tpu_custom_call.1} parent=15 // pred_check_branch
          %277 = sbr.rel (%p275) target = $region24
        $region23: #{tpu_custom_call.1} parent=15 // pred_region
          %s278 = sand.u32 %s69, 1
          %s279 = scalar_lea.sflag [#allocation3], %s278
          %s280 = sand.u32 %s69, 1
          %s281 = smul.addr %s280, 64
          %s282 = scalar_lea.vmem [#allocation2], %s281
          %s283 = smul.u32 8, %s25
          %s285 = ssub.s32 1024, 1024
          %286 = vsyncadd %s279, %s285
          %s287 = smul.addr %s24, 8
          %s288 = sadd.s32 %s283, %s287
          %s289 = smul.addr %s288, 128
          %s290 = scalar_lea.hbm %s1, %s289
          %s291 = sshll.u32 %s282, 4
          %s292 = int_to_ptr.vmem [resolvable:$true] %s291
          %297 = dma.hbm_to_vmem [thread:$0]  %s290, 1024, %s292, %s279, 128, 128, 8
        $region24: #{tpu_custom_call.1} parent=15 // pred_fallthru
          _
        // Predicated region
        $region25: #{tpu_custom_call.1} parent=15 // pred_check
          %p298 = pneg %p107
        $region26: #{tpu_custom_call.1} parent=15 // pred_check_branch
          %300 = sbr.rel (%p298) target = $region28
        $region27: #{tpu_custom_call.1} parent=15 // pred_region
          %s301 = smul.u32 8, %s25
          %p302 = scmp.lt.s32.totalorder %s24, 1
          %s303 = scalar_select %p302, %s24, 1
          %p304 = scmp.lt.s32.totalorder %s301, 7
          %s305 = scalar_select %p304, %s301, 7
          %s306 = smul.addr %s303, 8
          %s307 = sadd.s32 %s305, %s306
          %s308 = smul.addr %s307, 8
          %s309 = scalar_lea.vmem %s2, %s308
          %s310 = smul.u32 8, %s25
        $region28: #{tpu_custom_call.1} parent=15 // pred_fallthru
          _
        // Predicated region
        $region29: #{tpu_custom_call.1} parent=15 // pred_check
          %p311 = pneg %p133
        $region30: #{tpu_custom_call.1} parent=15 // pred_check_branch
          %313 = sbr.rel (%p311) target = $region32
        $region31: #{tpu_custom_call.1} parent=15 // pred_region
          %p314 = scmp.lt.s32.totalorder %s24, 1
          %s315 = scalar_select %p314, %s24, 1
          %s316 = scalar_lea.vmem %s3, %s315
        $region32: #{tpu_custom_call.1} parent=15 // pred_fallthru
          _
      $region16: #{tpu_custom_call.1} parent=5 // pred_fallthru
        _
      %p317 = scmp.le.s32.totalorder 1, %s17
      %p318 = scmp.lt.s32.totalorder %s17, 3
      %p319 = pnand %p317, %p318
      %p320 = pneg %p319
      // Predicated region
      $region33: #{tpu_custom_call.1} parent=5 // pred_check
        _
      $region34: #{tpu_custom_call.1} parent=5 // pred_check_branch
        %322 = sbr.rel (%p319) target = $region36
      $region35: #{tpu_custom_call.1} parent=5 // pred_region
        %s323 = ssub.s32 %s17, 1
        %s324 = sand.u32 %s72, 1
        %s325 = scalar_lea.sflag [#allocation3], %s324
        %s326 = sand.u32 %s72, 1
        %s327 = smul.addr %s326, 64
        %s328 = scalar_lea.vmem [#allocation2], %s327
        // Predicated region
        $region37: #{tpu_custom_call.1} parent=35 // pred_check
          %p329 = pneg %p85
        $region38: #{tpu_custom_call.1} parent=35 // pred_check_branch
          %331 = sbr.rel (%p329) target = $region40
        $region39: #{tpu_custom_call.1} parent=35 // pred_region
          %332 = dma.done %s325, 1024
        $region40: #{tpu_custom_call.1} parent=35 // pred_fallthru
          _
        %s333 = smul.u32 8, %s27
        %p334 = scmp.lt.s32.totalorder %s26, 1
        %s335 = scalar_select %p334, %s26, 1
        %p336 = scmp.lt.s32.totalorder %s333, 7
        %s337 = scalar_select %p336, %s333, 7
        %s338 = smul.addr %s335, 8
        %s339 = sadd.s32 %s337, %s338
        %s340 = smul.addr %s339, 8
        %s341 = scalar_lea.vmem %s0, %s340
        %p342 = pneg %p57
        %p343 = pneg %p54
        %s344 = sand.u32 %s72, 1
        %s345 = scalar_lea.sflag [#allocation3], %s344
        %s346 = sand.u32 %s72, 1
        %s347 = smul.addr %s346, 64
        %s348 = scalar_lea.vmem [#allocation2], %s347
        %p349 = pneg %p85
        %p350 = pneg %p82
        %s351 = smul.u32 8, %s27
        %p352 = scmp.lt.s32.totalorder %s26, 1
        %s353 = scalar_select %p352, %s26, 1
        %p354 = scmp.lt.s32.totalorder %s351, 7
        %s355 = scalar_select %p354, %s351, 7
        %s356 = smul.addr %s353, 8
        %s357 = sadd.s32 %s355, %s356
        %s358 = smul.addr %s357, 8
        %s359 = scalar_lea.vmem %s2, %s358
        %p360 = pneg %p113
        %p361 = pneg %p110
        %p362 = scmp.lt.s32.totalorder %s26, 1
        %s363 = scalar_select %p362, %s26, 1
        %s364 = scalar_lea.vmem %s3, %s363
        %p365 = pneg %p139
        %p366 = pneg %p136
        %p367 = pneg %p165
        %p368 = pneg %p162
        %p369 = scmp.lt.s32.totalorder %s26, 1
        %s370 = scalar_select %p369, %s26, 1
        %s371 = scalar_lea.vmem %s4, %s370
        %p372 = pneg %p191
        %p373 = pneg %p188
        %p374 = scmp.lt.s32.totalorder %s26, 1
        %s375 = scalar_select %p374, %s26, 1
        %s376 = scalar_lea.vmem %s5, %s375
        %p377 = pneg %p217
        %p378 = pneg %p214
        %p379 = scmp.lt.s32.totalorder %s26, 1
        %s380 = scalar_select %p379, %s26, 1
        %s381 = scalar_lea.vmem %s6, %s380
        %p382 = pneg %p243
        %p383 = pneg %p240
        %p384 = scmp.lt.s32.totalorder %s26, 1
        %s385 = scalar_select %p384, %s26, 1
        %s386 = scalar_lea.vmem %s7, %s385
        %s387 = smul.u32 8, %s27
        %p388 = scmp.lt.s32.totalorder %s26, 1
        %s389 = scalar_select %p388, %s26, 1
        %p390 = scmp.lt.s32.totalorder %s387, 7
        %s391 = scalar_select %p390, %s387, 7
        %s392 = smul.addr %s389, 8
        %s393 = sadd.s32 %s391, %s392
        %s394 = smul.addr %s393, 8
        %s395 = scalar_lea.vmem %s0, %s394
        %s396 = smul.u32 8, %s27
        %s397 = smul.u32 8, %s27
        %s398 = smul.u32 8, %s27
        %p399 = scmp.lt.s32.totalorder %s26, 1
        %s400 = scalar_select %p399, %s26, 1
        %p401 = scmp.lt.s32.totalorder %s398, 7
        %s402 = scalar_select %p401, %s398, 7
        %s403 = smul.addr %s400, 8
        %s404 = sadd.s32 %s402, %s403
        %s405 = smul.addr %s404, 8
        %s406 = scalar_lea.vmem %s2, %s405
        %s407 = smul.u32 8, %s27
        %p408 = scmp.lt.s32.totalorder %s26, 1
        %s409 = scalar_select %p408, %s26, 1
        %s410 = scalar_lea.vmem %s3, %s409
        %p411 = scmp.lt.s32.totalorder %s26, 1
        %s412 = scalar_select %p411, %s26, 1
        %s413 = scalar_lea.vmem %s4, %s412
        %p414 = scmp.lt.s32.totalorder %s26, 1
        %s415 = scalar_select %p414, %s26, 1
        %s416 = scalar_lea.vmem %s5, %s415
        %p417 = scmp.lt.s32.totalorder %s26, 1
        %s418 = scalar_select %p417, %s26, 1
        %s419 = scalar_lea.vmem %s6, %s418
        %p420 = scmp.lt.s32.totalorder %s26, 1
        %s421 = scalar_select %p420, %s26, 1
        %s422 = scalar_lea.vmem %s7, %s421
        %p423 = scmp.eq.s32.totalorder %s27, 0
        // Predicated region
        $region41: #{tpu_custom_call.1} parent=35 // pred_check
          %p424 = pneg %p423
        $region42: #{tpu_custom_call.1} parent=35 // pred_check_branch
          %426 = sbr.rel (%p424) target = $region44
        $region43: #{tpu_custom_call.1} parent=35 // pred_region
          %vm427 = vcmask 0
          %428 = vst.msk [vmem:[%s413] sm:$0x1] %vm427, 0.0
          %429 = vst.msk [vmem:[%s416] sm:$0x1] %vm427, 0.0
          %430 = vst.msk [vmem:[%s419] sm:$0x1] %vm427, 0.0
          %431 = vst.msk [vmem:[%s422] sm:$0x1] %vm427, 0.0
        $region44: #{tpu_custom_call.1} parent=35 // pred_fallthru
          _
        %v432 = vld [vmem:[%s395] sm:$0xff]
        %v433 = vld [vmem:[%s395 + $0x8] sm:$0xff]
        %v434 = vld [vmem:[%s395 + $0x10] sm:$0xff]
        %v435 = vld [vmem:[%s395 + $0x18] sm:$0xff]
        %v436 = vld [vmem:[%s395 + $0x20] sm:$0xff]
        %v437 = vld [vmem:[%s395 + $0x28] sm:$0xff]
        %v438 = vld [vmem:[%s395 + $0x30] sm:$0xff]
        %v439 = vld [vmem:[%s395 + $0x38] sm:$0xff]
        %v440 = vld [vmem:[%s328] sm:$0xff]
        %v441 = vld [vmem:[%s328 + $0x8] sm:$0xff]
        %v442 = vld [vmem:[%s328 + $0x10] sm:$0xff]
        %v443 = vld [vmem:[%s328 + $0x18] sm:$0xff]
        %v444 = vld [vmem:[%s328 + $0x20] sm:$0xff]
        %v445 = vld [vmem:[%s328 + $0x28] sm:$0xff]
        %v446 = vld [vmem:[%s328 + $0x30] sm:$0xff]
        %v447 = vld [vmem:[%s328 + $0x38] sm:$0xff]
        %v448 = vld [vmem:[%s406] sm:$0xff]
        %v449 = vld [vmem:[%s406 + $0x8] sm:$0xff]
        %v450 = vld [vmem:[%s406 + $0x10] sm:$0xff]
        %v451 = vld [vmem:[%s406 + $0x18] sm:$0xff]
        %v452 = vld [vmem:[%s406 + $0x20] sm:$0xff]
        %v453 = vld [vmem:[%s406 + $0x28] sm:$0xff]
        %v454 = vld [vmem:[%s406 + $0x30] sm:$0xff]
        %v455 = vld [vmem:[%s406 + $0x38] sm:$0xff]
        %v456 = vld [vmem:[%s410] sm:$0x1]
        %458 = vset.pattern.permute.xlu0 0
        %459 = vperm.xlu0 %458, %v448
        %v460 = vpop.permute.xlu0 %459
        %463 = vset.pattern.permute.xlu0 0
        %464 = vperm.xlu0 %463, %v449
        %v465 = vpop.permute.xlu0 %464
        %468 = vset.pattern.permute.xlu0 0
        %469 = vperm.xlu0 %468, %v450
        %v470 = vpop.permute.xlu0 %469
        %473 = vset.pattern.permute.xlu0 0
        %474 = vperm.xlu0 %473, %v451
        %v475 = vpop.permute.xlu0 %474
        %478 = vset.pattern.permute.xlu0 0
        %479 = vperm.xlu0 %478, %v452
        %v480 = vpop.permute.xlu0 %479
        %483 = vset.pattern.permute.xlu0 0
        %484 = vperm.xlu0 %483, %v453
        %v485 = vpop.permute.xlu0 %484
        %488 = vset.pattern.permute.xlu0 0
        %489 = vperm.xlu0 %488, %v454
        %v490 = vpop.permute.xlu0 %489
        %493 = vset.pattern.permute.xlu0 0
        %494 = vperm.xlu0 %493, %v455
        %v495 = vpop.permute.xlu0 %494
        %v498 = vlaneseq
        %v499 = vshrl.u32 %v498, 7
        %v500 = vsub.s32 0, %v499
        %v501 = vrot.slane %v456, %v500
        %v503 = vmul.f32 %v460, %v501
        %v504 = vmul.f32 %v465, %v501
        %v505 = vmul.f32 %v470, %v501
        %v506 = vmul.f32 %v475, %v501
        %v507 = vmul.f32 %v480, %v501
        %v508 = vmul.f32 %v485, %v501
        %v509 = vmul.f32 %v490, %v501
        %v510 = vmul.f32 %v495, %v501
        %v511 = vmax.f32 %v432, 1e-06
        %v512 = vmax.f32 %v433, 1e-06
        %v513 = vmax.f32 %v434, 1e-06
        %v514 = vmax.f32 %v435, 1e-06
        %v515 = vmax.f32 %v436, 1e-06
        %v516 = vmax.f32 %v437, 1e-06
        %v517 = vmax.f32 %v438, 1e-06
        %v518 = vmax.f32 %v439, 1e-06
        %v519 = vmin.f32 %v511, 0.999999
        %v520 = vmin.f32 %v512, 0.999999
        %v521 = vmin.f32 %v513, 0.999999
        %v522 = vmin.f32 %v514, 0.999999
        %v523 = vmin.f32 %v515, 0.999999
        %v524 = vmin.f32 %v516, 0.999999
        %v525 = vmin.f32 %v517, 0.999999
        %v526 = vmin.f32 %v518, 0.999999
        %vm527 = vcmp.eq.f32.partialorder %v440, 1.0
        %vm528 = vcmp.eq.f32.partialorder %v441, 1.0
        %vm529 = vcmp.eq.f32.partialorder %v442, 1.0
        %vm530 = vcmp.eq.f32.partialorder %v443, 1.0
        %vm531 = vcmp.eq.f32.partialorder %v444, 1.0
        %vm532 = vcmp.eq.f32.partialorder %v445, 1.0
        %vm533 = vcmp.eq.f32.partialorder %v446, 1.0
        %vm534 = vcmp.eq.f32.partialorder %v447, 1.0
        %vm535 = vcmp.eq.f32.partialorder %v440, 0.0
        %vm536 = vcmp.eq.f32.partialorder %v441, 0.0
        %vm537 = vcmp.eq.f32.partialorder %v442, 0.0
        %vm538 = vcmp.eq.f32.partialorder %v443, 0.0
        %vm539 = vcmp.eq.f32.partialorder %v444, 0.0
        %vm540 = vcmp.eq.f32.partialorder %v445, 0.0
        %vm541 = vcmp.eq.f32.partialorder %v446, 0.0
        %vm542 = vcmp.eq.f32.partialorder %v447, 0.0
        %v543 = vsub.f32 1.0, %v519
        %v544 = vsub.f32 1.0, %v520
        %v545 = vsub.f32 1.0, %v521
        %v546 = vsub.f32 1.0, %v522
        %v547 = vsub.f32 1.0, %v523
        %v548 = vsub.f32 1.0, %v524
        %v549 = vsub.f32 1.0, %v525
        %v550 = vsub.f32 1.0, %v526
        %v551 = vsel %vm527, %v519, %v543
        %v552 = vsel %vm528, %v520, %v544
        %v553 = vsel %vm529, %v521, %v545
        %v554 = vsel %vm530, %v522, %v546
        %v555 = vsel %vm531, %v523, %v547
        %v556 = vsel %vm532, %v524, %v548
        %v557 = vsel %vm533, %v525, %v549
        %v558 = vsel %vm534, %v526, %v550
        %v559 = vsub.f32 1.0, %v551
        %v560 = vsub.f32 1.0, %v552
        %v561 = vsub.f32 1.0, %v553
        %v562 = vsub.f32 1.0, %v554
        %v563 = vsub.f32 1.0, %v555
        %v564 = vsub.f32 1.0, %v556
        %v565 = vsub.f32 1.0, %v557
        %v566 = vsub.f32 1.0, %v558
        %v567 = vmul.f32 %v559, %v559
        %v568 = vmul.f32 %v560, %v560
        %v569 = vmul.f32 %v561, %v561
        %v570 = vmul.f32 %v562, %v562
        %v571 = vmul.f32 %v563, %v563
        %v572 = vmul.f32 %v564, %v564
        %v573 = vmul.f32 %v565, %v565
        %v574 = vmul.f32 %v566, %v566
        %v575 = vmul.f32 %v567, -0.25
        %v576 = vmul.f32 %v568, -0.25
        %v577 = vmul.f32 %v569, -0.25
        %v578 = vmul.f32 %v570, -0.25
        %v579 = vmul.f32 %v571, -0.25
        %v580 = vmul.f32 %v572, -0.25
        %v581 = vmul.f32 %v573, -0.25
        %v582 = vmul.f32 %v574, -0.25
        %v583 = vlog2.pop %v551
        %v584 = vmul.f32 %v583, 0.6931472
        %v585 = vlog2.pop %v552
        %v586 = vmul.f32 %v585, 0.6931472
        %v587 = vlog2.pop %v553
        %v588 = vmul.f32 %v587, 0.6931472
        %v589 = vlog2.pop %v554
        %v590 = vmul.f32 %v589, 0.6931472
        %v591 = vlog2.pop %v555
        %v592 = vmul.f32 %v591, 0.6931472
        %v593 = vlog2.pop %v556
        %v594 = vmul.f32 %v593, 0.6931472
        %v595 = vlog2.pop %v557
        %v596 = vmul.f32 %v595, 0.6931472
        %v597 = vlog2.pop %v558
        %v598 = vmul.f32 %v597, 0.6931472
        %v599 = vmul.f32 %v575, %v584
        %v600 = vmul.f32 %v576, %v586
        %v601 = vmul.f32 %v577, %v588
        %v602 = vmul.f32 %v578, %v590
        %v603 = vmul.f32 %v579, %v592
        %v604 = vmul.f32 %v580, %v594
        %v605 = vmul.f32 %v581, %v596
        %v606 = vmul.f32 %v582, %v598
        %v607 = vmul.f32 %v599, %v503
        %v608 = vmul.f32 %v600, %v504
        %v609 = vmul.f32 %v601, %v505
        %v610 = vmul.f32 %v602, %v506
        %v611 = vmul.f32 %v603, %v507
        %v612 = vmul.f32 %v604, %v508
        %v613 = vmul.f32 %v605, %v509
        %v614 = vmul.f32 %v606, %v510
        %v615 = vld [vmem:[%s413] sm:$0x1]
        %v616 = vsel %vm527, %v607, 0.0
        %v617 = vsel %vm528, %v608, 0.0
        %v618 = vsel %vm529, %v609, 0.0
        %v619 = vsel %vm530, %v610, 0.0
        %v620 = vsel %vm531, %v611, 0.0
        %v621 = vsel %vm532, %v612, 0.0
        %v622 = vsel %vm533, %v613, 0.0
        %v623 = vsel %vm534, %v614, 0.0
        %vm624 = vcmask 523264
        %v625 = vsel %vm624, %v616, 0.0
        %v626 = vsel %vm624, %v617, 0.0
        %v627 = vadd.f32 %v625, %v626
        %v628 = vsel %vm624, %v618, 0.0
        %v629 = vadd.f32 %v627, %v628
        %v630 = vsel %vm624, %v619, 0.0
        %v631 = vadd.f32 %v629, %v630
        %v632 = vsel %vm624, %v620, 0.0
        %v633 = vadd.f32 %v631, %v632
        %v634 = vsel %vm624, %v621, 0.0
        %v635 = vadd.f32 %v633, %v634
        %v636 = vsel %vm624, %v622, 0.0
        %v637 = vadd.f32 %v635, %v636
        %v638 = vsel %vm624, %v623, 0.0
        %v639 = vadd.f32 %v637, %v638
        %640 = vadd.xlane.f32.xlu0 %v639
        %v641 = vpop.xlane.xlu0 %640
        %v642 = vrot.slane %v641, 4
        %v643 = vadd.f32 %v641, %v642
        %v644 = vrot.slane %v643, 2
        %v645 = vadd.f32 %v643, %v644
        %v646 = vrot.slane %v645, 1
        %v647 = vadd.f32 %v645, %v646
        %s648 = vtos %v647
        %v649 = vstv %s648
        %v650 = vadd.f32 %v615, %v649
        %vm651 = vcmask 0
        %652 = vst.msk [vmem:[%s413] sm:$0x1] %vm651, %v650
        %v653 = vld [vmem:[%s416] sm:$0x1]
        %v654 = vsel %vm527, 1, 0
        %v655 = vsel %vm528, 1, 0
        %v656 = vsel %vm529, 1, 0
        %v657 = vsel %vm530, 1, 0
        %v658 = vsel %vm531, 1, 0
        %v659 = vsel %vm532, 1, 0
        %v660 = vsel %vm533, 1, 0
        %v661 = vsel %vm534, 1, 0
        %v662 = vcvt.s32.f32 %v654
        %v663 = vcvt.s32.f32 %v655
        %v664 = vcvt.s32.f32 %v656
        %v665 = vcvt.s32.f32 %v657
        %v666 = vcvt.s32.f32 %v658
        %v667 = vcvt.s32.f32 %v659
        %v668 = vcvt.s32.f32 %v660
        %v669 = vcvt.s32.f32 %v661
        %v670 = vsel %vm624, %v662, 0.0
        %v671 = vsel %vm624, %v663, 0.0
        %v672 = vadd.f32 %v670, %v671
        %v673 = vsel %vm624, %v664, 0.0
        %v674 = vadd.f32 %v672, %v673
        %v675 = vsel %vm624, %v665, 0.0
        %v676 = vadd.f32 %v674, %v675
        %v677 = vsel %vm624, %v666, 0.0
        %v678 = vadd.f32 %v676, %v677
        %v679 = vsel %vm624, %v667, 0.0
        %v680 = vadd.f32 %v678, %v679
        %v681 = vsel %vm624, %v668, 0.0
        %v682 = vadd.f32 %v680, %v681
        %v683 = vsel %vm624, %v669, 0.0
        %v684 = vadd.f32 %v682, %v683
        %685 = vadd.xlane.f32.xlu0 %v684
        %v686 = vpop.xlane.xlu0 %685
        %v687 = vrot.slane %v686, 4
        %v688 = vadd.f32 %v686, %v687
        %v689 = vrot.slane %v688, 2
        %v690 = vadd.f32 %v688, %v689
        %v691 = vrot.slane %v690, 1
        %v692 = vadd.f32 %v690, %v691
        %s693 = vtos %v692
        %v694 = vstv %s693
        %v695 = vadd.f32 %v653, %v694
        %696 = vst.msk [vmem:[%s416] sm:$0x1] %vm651, %v695
        %v697 = vld [vmem:[%s419] sm:$0x1]
        %v698 = vsel %vm535, %v607, 0.0
        %v699 = vsel %vm536, %v608, 0.0
        %v700 = vsel %vm537, %v609, 0.0
        %v701 = vsel %vm538, %v610, 0.0
        %v702 = vsel %vm539, %v611, 0.0
        %v703 = vsel %vm540, %v612, 0.0
        %v704 = vsel %vm541, %v613, 0.0
        %v705 = vsel %vm542, %v614, 0.0
        %v706 = vsel %vm624, %v698, 0.0
        %v707 = vsel %vm624, %v699, 0.0
        %v708 = vadd.f32 %v706, %v707
        %v709 = vsel %vm624, %v700, 0.0
        %v710 = vadd.f32 %v708, %v709
        %v711 = vsel %vm624, %v701, 0.0
        %v712 = vadd.f32 %v710, %v711
        %v713 = vsel %vm624, %v702, 0.0
        %v714 = vadd.f32 %v712, %v713
        %v715 = vsel %vm624, %v703, 0.0
        %v716 = vadd.f32 %v714, %v715
        %v717 = vsel %vm624, %v704, 0.0
        %v718 = vadd.f32 %v716, %v717
        %v719 = vsel %vm624, %v705, 0.0
        %v720 = vadd.f32 %v718, %v719
        %721 = vadd.xlane.f32.xlu0 %v720
        %v722 = vpop.xlane.xlu0 %721
        %v723 = vrot.slane %v722, 4
        %v724 = vadd.f32 %v722, %v723
        %v725 = vrot.slane %v724, 2
        %v726 = vadd.f32 %v724, %v725
        %v727 = vrot.slane %v726, 1
        %v728 = vadd.f32 %v726, %v727
        %s729 = vtos %v728
        %v730 = vstv %s729
        %v731 = vadd.f32 %v697, %v730
        %732 = vst.msk [vmem:[%s419] sm:$0x1] %vm651, %v731
        %v733 = vld [vmem:[%s422] sm:$0x1]
        %v734 = vsel %vm535, 1, 0
        %v735 = vsel %vm536, 1, 0
        %v736 = vsel %vm537, 1, 0
        %v737 = vsel %vm538, 1, 0
        %v738 = vsel %vm539, 1, 0
        %v739 = vsel %vm540, 1, 0
        %v740 = vsel %vm541, 1, 0
        %v741 = vsel %vm542, 1, 0
        %v742 = vcvt.s32.f32 %v734
        %v743 = vcvt.s32.f32 %v735
        %v744 = vcvt.s32.f32 %v736
        %v745 = vcvt.s32.f32 %v737
        %v746 = vcvt.s32.f32 %v738
        %v747 = vcvt.s32.f32 %v739
        %v748 = vcvt.s32.f32 %v740
        %v749 = vcvt.s32.f32 %v741
        %v750 = vsel %vm624, %v742, 0.0
        %v751 = vsel %vm624, %v743, 0.0
        %v752 = vadd.f32 %v750, %v751
        %v753 = vsel %vm624, %v744, 0.0
        %v754 = vadd.f32 %v752, %v753
        %v755 = vsel %vm624, %v745, 0.0
        %v756 = vadd.f32 %v754, %v755
        %v757 = vsel %vm624, %v746, 0.0
        %v758 = vadd.f32 %v756, %v757
        %v759 = vsel %vm624, %v747, 0.0
        %v760 = vadd.f32 %v758, %v759
        %v761 = vsel %vm624, %v748, 0.0
        %v762 = vadd.f32 %v760, %v761
        %v763 = vsel %vm624, %v749, 0.0
        %v764 = vadd.f32 %v762, %v763
        %765 = vadd.xlane.f32.xlu0 %v764
        %v766 = vpop.xlane.xlu0 %765
        %v767 = vrot.slane %v766, 4
        %v768 = vadd.f32 %v766, %v767
        %v769 = vrot.slane %v768, 2
        %v770 = vadd.f32 %v768, %v769
        %v771 = vrot.slane %v770, 1
        %v772 = vadd.f32 %v770, %v771
        %s773 = vtos %v772
        %v774 = vstv %s773
        %v775 = vadd.f32 %v733, %v774
        %776 = vst.msk [vmem:[%s422] sm:$0x1] %vm651, %v775
        %p777 = scmp.lt.s32.totalorder %s26, 1
        %s778 = scalar_select %p777, %s26, 1
        %s779 = scalar_lea.vmem %s4, %s778
        %p780 = scmp.lt.s32.totalorder %s26, 1
        %s781 = scalar_select %p780, %s26, 1
        %s782 = scalar_lea.vmem %s5, %s781
        %p783 = scmp.lt.s32.totalorder %s26, 1
        %s784 = scalar_select %p783, %s26, 1
        %s785 = scalar_lea.vmem %s6, %s784
        %p786 = scmp.lt.s32.totalorder %s26, 1
        %s787 = scalar_select %p786, %s26, 1
        %s788 = scalar_lea.vmem %s7, %s787
        // Predicated region
        $region45: #{tpu_custom_call.1} parent=35 // pred_check
          %p789 = pneg %p162
        $region46: #{tpu_custom_call.1} parent=35 // pred_check_branch
          %791 = sbr.rel (%p789) target = $region48
        $region47: #{tpu_custom_call.1} parent=35 // pred_region
          _
        $region48: #{tpu_custom_call.1} parent=35 // pred_fallthru
          _
        // Predicated region
        $region49: #{tpu_custom_call.1} parent=35 // pred_check
          %p792 = pneg %p188
        $region50: #{tpu_custom_call.1} parent=35 // pred_check_branch
          %794 = sbr.rel (%p792) target = $region52
        $region51: #{tpu_custom_call.1} parent=35 // pred_region
          _
        $region52: #{tpu_custom_call.1} parent=35 // pred_fallthru
          _
        // Predicated region
        $region53: #{tpu_custom_call.1} parent=35 // pred_check
          %p795 = pneg %p214
        $region54: #{tpu_custom_call.1} parent=35 // pred_check_branch
          %797 = sbr.rel (%p795) target = $region56
        $region55: #{tpu_custom_call.1} parent=35 // pred_region
          _
        $region56: #{tpu_custom_call.1} parent=35 // pred_fallthru
          _
        // Predicated region
        $region57: #{tpu_custom_call.1} parent=35 // pred_check
          %p798 = pneg %p240
        $region58: #{tpu_custom_call.1} parent=35 // pred_check_branch
          %800 = sbr.rel (%p798) target = $region60
        $region59: #{tpu_custom_call.1} parent=35 // pred_region
          _
        $region60: #{tpu_custom_call.1} parent=35 // pred_fallthru
          _
      $region36: #{tpu_custom_call.1} parent=5 // pred_fallthru
        _
      %p801 = scmp.le.s32.totalorder 2, %s17
      // Predicated region
      $region61: #{tpu_custom_call.1} parent=5 // pred_check
        %p802 = pneg %p801
      $region62: #{tpu_custom_call.1} parent=5 // pred_check_branch
        %804 = sbr.rel (%p802) target = $region64
      $region63: #{tpu_custom_call.1} parent=5 // pred_region
        %s805 = ssub.s32 %s17, 2
        // Predicated region
        $region65: #{tpu_custom_call.1} parent=63 // pred_check
          %p806 = pneg %p168
        $region66: #{tpu_custom_call.1} parent=63 // pred_check_branch
          %808 = sbr.rel (%p806) target = $region68
        $region67: #{tpu_custom_call.1} parent=63 // pred_region
          %p809 = scmp.lt.s32.totalorder %s28, 1
          %s810 = scalar_select %p809, %s28, 1
          %s811 = scalar_lea.vmem %s4, %s810
        $region68: #{tpu_custom_call.1} parent=63 // pred_fallthru
          _
        // Predicated region
        $region69: #{tpu_custom_call.1} parent=63 // pred_check
          %p812 = pneg %p194
        $region70: #{tpu_custom_call.1} parent=63 // pred_check_branch
          %814 = sbr.rel (%p812) target = $region72
        $region71: #{tpu_custom_call.1} parent=63 // pred_region
          %p815 = scmp.lt.s32.totalorder %s28, 1
          %s816 = scalar_select %p815, %s28, 1
          %s817 = scalar_lea.vmem %s5, %s816
        $region72: #{tpu_custom_call.1} parent=63 // pred_fallthru
          _
        // Predicated region
        $region73: #{tpu_custom_call.1} parent=63 // pred_check
          %p818 = pneg %p220
        $region74: #{tpu_custom_call.1} parent=63 // pred_check_branch
          %820 = sbr.rel (%p818) target = $region76
        $region75: #{tpu_custom_call.1} parent=63 // pred_region
          %p821 = scmp.lt.s32.totalorder %s28, 1
          %s822 = scalar_select %p821, %s28, 1
          %s823 = scalar_lea.vmem %s6, %s822
        $region76: #{tpu_custom_call.1} parent=63 // pred_fallthru
          _
        // Predicated region
        $region77: #{tpu_custom_call.1} parent=63 // pred_check
          %p824 = pneg %p246
        $region78: #{tpu_custom_call.1} parent=63 // pred_check_branch
          %826 = sbr.rel (%p824) target = $region80
        $region79: #{tpu_custom_call.1} parent=63 // pred_region
          %p827 = scmp.lt.s32.totalorder %s28, 1
          %s828 = scalar_select %p827, %s28, 1
          %s829 = scalar_lea.vmem %s7, %s828
        $region80: #{tpu_custom_call.1} parent=63 // pred_fallthru
          _
      $region64: #{tpu_custom_call.1} parent=5 // pred_fallthru
        _
    $region6: #{tpu_custom_call.1} parent=1 // loop_footer
      %s21 = sadd.s32 1, %s17
    $region7: #{tpu_custom_call.1} parent=1 // loop_footer_branch
      %16 = sbr.rel target = $region3
    $region8: #{tpu_custom_call.1} parent=1 // loop_exit
      _
    %830 = vsyncpa [#allocation3], 1
    %s831 = scalar_lea.sflag [#allocation3], 1
    %832 = vsyncpa %s831, 1

</llo_original>
